<compile_context>
chip_gen: v6e
topology: v6e:2x2x1
jax: 0.10.0
libtpu: 0.0.40
codegen_flags: <defaults>
</compile_context>

<pallas_src>
import functools

import jax
import jax.numpy as jnp
import numpy as np
from jax.experimental import pallas as pl
from jax.experimental.pallas import tpu as pltpu


def _round_up(x: int, m: int) -> int:
    return ((x + m - 1) // m) * m


_VMEM_CAP = 44 * 1024 * 1024  # headroom under v7x's 64 MiB physical VMEM


# ---------------------------------------------------------------------------
# Kernels
# ---------------------------------------------------------------------------

def _fused_se_kernel(x_ref, w1t_ref, b1_ref, w2t_ref, b2_ref, o_ref, *, inv_hw):
    """One batch-tile of SE: pool -> Linear -> SiLU -> Linear -> sigmoid -> scale.

    x_ref : (Bt, C, HW)  input block, resident in VMEM for this grid step
    w1t   : (C, dim); b1: (1, dim); w2t: (dim, C); b2: (1, C)  (f32, resident)
    o_ref : (Bt, C, HW)  output block
    """
    xv = x_ref[...].astype(jnp.float32)                        # (Bt, C, HW)
    # Spatial dim is the TRUE HW (no padding), so sum * 1/HW is the exact mean.
    pooled = jnp.sum(xv, axis=-1) * inv_hw                     # (Bt, C)
    h = jnp.dot(pooled, w1t_ref[...],
                preferred_element_type=jnp.float32) + b1_ref[...]
    h = h * jax.nn.sigmoid(h)                                  # SiLU
    z = jnp.dot(h, w2t_ref[...],
                preferred_element_type=jnp.float32) + b2_ref[...]
    gate = jax.nn.sigmoid(z)                                   # (Bt, C)
    o_ref[...] = (xv * gate[:, :, None]).astype(o_ref.dtype)


# --- fallback (image too large to keep resident): channel-tiled 3 passes ----

def _pool_kernel(x_ref, p_ref, *, inv_hw):
    """x_ref: (Ct, HW) -> p_ref: (Ct, 1) mean over the spatial axis (f32)."""
    p_ref[...] = (jnp.sum(x_ref[...].astype(jnp.float32), axis=-1, keepdims=True)
                  * inv_hw)


def _excite_kernel(p_ref, w1t_ref, b1_ref, w2t_ref, b2_ref, s_ref):
    """Batched excitation: (B,C) -> Linear -> SiLU -> Linear -> sigmoid -> (B,C)."""
    p = p_ref[...]
    h = jnp.dot(p, w1t_ref[...], preferred_element_type=jnp.float32) + b1_ref[...]
    h = h * jax.nn.sigmoid(h)
    z = jnp.dot(h, w2t_ref[...], preferred_element_type=jnp.float32) + b2_ref[...]
    s_ref[...] = jax.nn.sigmoid(z)


def _scale_kernel(x_ref, g_ref, o_ref):
    """o = x * gate; x_ref: (Ct, HW), g_ref: (Ct, 1)."""
    o_ref[...] = (x_ref[...].astype(jnp.float32) * g_ref[...]).astype(o_ref.dtype)


# ---------------------------------------------------------------------------
# Sizing helpers
# ---------------------------------------------------------------------------

def _default_block_bytes():
    # Bigger blocks amortize the ~0.35 us/grid-step cost.  v7x (64 MiB VMEM but
    # 3.2 TB/s HBM) wants ~8 MiB blocks; 4 MiB is already fine on v5e/v6e.
    try:
        vmem = pltpu.get_tpu_info().vmem_capacity_bytes
        return 8 * 1024 * 1024 if vmem <= 64 * 1024 * 1024 else 4 * 1024 * 1024
    except Exception:  # noqa: BLE001 - fall back to a safe default
        return 4 * 1024 * 1024


def _largest_divisor(n: int, cap: int) -> int:
    cap = max(1, min(n, cap))
    for d in range(cap, 0, -1):
        if n % d == 0:
            return d
    return 1


def _padded_elems(bt: int, C: int, HW: int) -> int:
    # VMEM stores blocks in (8, 128)-tiled layout.
    return bt * _round_up(C, 8) * _round_up(HW, 128)


def _fused_vmem_need(bt, C, HW, itemsize, weight_bytes):
    blk = _padded_elems(bt, C, HW)
    io = 4 * blk * itemsize          # double-buffered input + output blocks
    tmp = 2 * blk * 4                # f32 upcast + f32 scaled product
    return io + tmp + 2 * weight_bytes + (2 << 20)


def _pick_channel_tile(C, HW, itemsize, target_bytes):
    """Largest channel tile (divisor of C, multiple of 8 or == C) fitting target."""
    for d in range(C, 0, -1):
        if C % d:
            continue
        if d != C and d % 8:
            continue
        if _padded_elems(1, d, HW) * itemsize <= target_bytes:
            return d
    for d in range(1, C + 1):
        if C % d == 0 and (d % 8 == 0 or d == C):
            return d
    return C


# ---------------------------------------------------------------------------
# Wrapper
# ---------------------------------------------------------------------------

def se_forward(x_nchw, w1, b1, w2, b2, *, target_block_bytes=None, multipass=None):
    """SE forward. x: (B,C,H,W); w1: (dim,C); b1: (dim,); w2: (C,dim); b2: (C,)."""
    B, C, H, W = x_nchw.shape
    dim = w1.shape[0]
    HW = H * W
    itemsize = jnp.dtype(x_nchw.dtype).itemsize
    if target_block_bytes is None:
        target_block_bytes = _default_block_bytes()

    # Free row-major collapse; no data movement, no padding, no transpose.
    x3 = x_nchw.reshape(B, C, HW)

    w1t = jnp.asarray(w1, jnp.float32).T                  # (C, dim)
    w2t = jnp.asarray(w2, jnp.float32).T                  # (dim, C)
    b1_2d = jnp.asarray(b1, jnp.float32).reshape(1, dim)
    b2_2d = jnp.asarray(b2, jnp.float32).reshape(1, C)
    weight_bytes = 4 * (C * dim + dim + dim * C + C)

    per_image_bytes = _padded_elems(1, C, HW) * itemsize

    # ---- batch-tile selection for the fused path --------------------------
    bt_cap = max(1, target_block_bytes // max(1, per_image_bytes))
    if B >= 2:
        bt_cap = min(bt_cap, B - 1)   # keep >= 2 grid steps for the 2 v7x TCs
    Bt = _largest_divisor(B, bt_cap)
    while Bt > 1 and _fused_vmem_need(Bt, C, HW, itemsize, weight_bytes) > _VMEM_CAP:
        Bt = _largest_divisor(B, Bt - 1)

    fused_need = _fused_vmem_need(Bt, C, HW, itemsize, weight_bytes)
    use_fused = (multipass is not True) and fused_need <= _VMEM_CAP

    if use_fused:
        n_bt = B // Bt
        vmem_limit = int(min(48 << 20, max(16 << 20, fused_need)))
        const2d = lambda i: (0, 0)

        out = pl.pallas_call(
            functools.partial(_fused_se_kernel, inv_hw=1.0 / HW),
            out_shape=jax.ShapeDtypeStruct((B, C, HW), x_nchw.dtype),
            grid_spec=pltpu.PrefetchScalarGridSpec(
                num_scalar_prefetch=0,
                grid=(n_bt,),
                in_specs=[
                    pl.BlockSpec((Bt, C, HW), lambda i: (i, 0, 0)),   # x (1R)
                    pl.BlockSpec((C, dim), const2d),                  # w1t resident
                    pl.BlockSpec((1, dim), const2d),                  # b1
                    pl.BlockSpec((dim, C), const2d),                  # w2t
                    pl.BlockSpec((1, C), const2d),                    # b2
                ],
                out_specs=pl.BlockSpec((Bt, C, HW), lambda i: (i, 0, 0)),
            ),
            compiler_params=pltpu.CompilerParams(
                dimension_semantics=("parallel",),
                vmem_limit_bytes=vmem_limit),
        )(x3, w1t, b1_2d, w2t, b2_2d)
        return out.reshape(B, C, H, W)

    # ---- fallback: image too large to keep resident in VMEM ----------------
    # Channel-tiled 3 passes (pool / tiny excite / scale), still no layout
    # copies of x.  The extra tiny excite launch is negligible next to
    # streaming a multi-MiB image twice.
    Ct = _pick_channel_tile(C, HW, itemsize, target_block_bytes)
    n_ct = C // Ct
    blk = _padded_elems(1, Ct, HW)
    need = 4 * blk * itemsize + 2 * blk * 4 + (2 << 20)
    vmem_limit = int(min(48 << 20, max(16 << 20, need)))

    pooled = pl.pallas_call(
        functools.partial(_pool_kernel, inv_hw=1.0 / HW),
        out_shape=jax.ShapeDtypeStruct((B, C, 1), jnp.float32),
        grid_spec=pltpu.PrefetchScalarGridSpec(
            num_scalar_prefetch=0,
            grid=(B, n_ct),
            in_specs=[pl.BlockSpec((pl.Squeezed(), Ct, HW), lambda b, c: (b, c, 0))],
            out_specs=pl.BlockSpec((pl.Squeezed(), Ct, 1), lambda b, c: (b, c, 0)),
        ),
        compiler_params=pltpu.CompilerParams(
            dimension_semantics=("parallel", "parallel"),
            vmem_limit_bytes=vmem_limit),
    )(x3)

    gate = pl.pallas_call(
        _excite_kernel,
        out_shape=jax.ShapeDtypeStruct((B, C), jnp.float32),
    )(pooled.reshape(B, C), w1t, b1_2d, w2t, b2_2d)

    out = pl.pallas_call(
        _scale_kernel,
        out_shape=jax.ShapeDtypeStruct((B, C, HW), x_nchw.dtype),
        grid_spec=pltpu.PrefetchScalarGridSpec(
            num_scalar_prefetch=0,
            grid=(B, n_ct),
            in_specs=[pl.BlockSpec((pl.Squeezed(), Ct, HW), lambda b, c: (b, c, 0)),
                      pl.BlockSpec((pl.Squeezed(), Ct, 1), lambda b, c: (b, c, 0))],
            out_specs=pl.BlockSpec((pl.Squeezed(), Ct, HW), lambda b, c: (b, c, 0)),
        ),
        compiler_params=pltpu.CompilerParams(
            dimension_semantics=("parallel", "parallel"),
            vmem_limit_bytes=vmem_limit),
    )(x3, gate.reshape(B, C, 1))
    return out.reshape(B, C, H, W)


# ---------------------------------------------------------------------------
# Reference + tests
# ---------------------------------------------------------------------------

def se_reference(x_nchw, w1, b1, w2, b2):
    """Pure-JAX reference matching the PyTorch module (f32 math)."""
    xf = x_nchw.astype(jnp.float32)
    pooled = jnp.mean(xf, axis=(2, 3))                    # (B, C)
    h = pooled @ w1.T + b1
    h = h * jax.nn.sigmoid(h)                             # SiLU
    s = jax.nn.sigmoid(h @ w2.T + b2)                     # (B, C)
    return xf * s[:, :, None, None]


def _make_params(key, C, r):
    dim = C // r
    k1, k2, k3, k4 = jax.random.split(key, 4)
    w1 = jax.random.normal(k1, (dim, C), jnp.float32) * 0.1   # Linear(outp -> dim).weight
    b1 = jax.random.normal(k2, (dim,), jnp.float32) * 0.1
    w2 = jax.random.normal(k3, (C, dim), jnp.float32) * 0.1   # Linear(dim -> outp).weight
    b2 = jax.random.normal(k4, (C,), jnp.float32) * 0.1
    return w1, b1, w2, b2


if __name__ == "__main__":
    key = jax.random.PRNGKey(0)

    cases = [
        # (B, C, H, W, r, dtype, rtol, atol, multipass)
        (2, 8, 16, 16, 4, jnp.float32, 1e-5, 1e-5, None),    # fused, Bt=1
        (2, 128, 7, 7, 4, jnp.float32, 1e-5, 1e-5, None),    # fused, HW=49 (EffNetV2-ish)
        (4, 16, 8, 8, 4, jnp.float32, 1e-5, 1e-5, None),     # fused, batch tile Bt=2
        (3, 8, 7, 7, 4, jnp.float32, 1e-5, 1e-5, None),      # fused, odd batch
        (2, 8, 16, 16, 4, jnp.bfloat16, 2e-2, 2e-2, None),   # bf16 I/O, f32 math in-kernel
        (2, 16, 16, 16, 4, jnp.float32, 1e-5, 1e-5, True),   # forced multipass fallback
    ]

    for (B, C, H, W, r, dtype, rtol, atol, multipass) in cases:
        key, kx, kp = jax.random.split(key, 3)
        x = jax.random.normal(kx, (B, C, H, W), jnp.float32).astype(dtype)
        w1, b1, w2, b2 = _make_params(kp, C, r)

        out = jax.block_until_ready(se_forward(x, w1, b1, w2, b2, multipass=multipass))
        ref = se_reference(x, w1, b1, w2, b2)
        np.testing.assert_allclose(np.asarray(out, dtype=np.float32),
                                   np.asarray(ref, dtype=np.float32),
                                   rtol=rtol, atol=atol)

    print("KERNEL_OK")
</pallas_src>

<mosaic_0001>
module attributes {stable_mosaic.version = 11 : i64} {
  func.func @_fused_se_kernel(%arg0: i32, %arg1: memref<1x8x256xf32, #tpu.memory_space<vmem>>, %arg2: memref<8x2xf32, #tpu.memory_space<vmem>>, %arg3: memref<1x2xf32, #tpu.memory_space<vmem>>, %arg4: memref<2x8xf32, #tpu.memory_space<vmem>>, %arg5: memref<1x8xf32, #tpu.memory_space<vmem>>, %arg6: memref<1x8x256xf32, #tpu.memory_space<vmem>>) attributes {dimension_semantics = [#tpu.dimension_semantics<parallel>], iteration_bounds = array<i64: 2>, scalar_prefetch = 0 : i64, scratch_operands = 0 : i64, tpu.core_type = #tpu.core_type<tc>, window_params = [{transform_indices = @transform_0, window_bounds = array<i64: 1, 8, 256>}, {pipeline_mode = #tpu.pipeline_mode<synchronous>, transform_indices = @transform_1, window_bounds = array<i64: 8, 2>}, {pipeline_mode = #tpu.pipeline_mode<synchronous>, transform_indices = @transform_2, window_bounds = array<i64: 1, 2>}, {pipeline_mode = #tpu.pipeline_mode<synchronous>, transform_indices = @transform_3, window_bounds = array<i64: 2, 8>}, {pipeline_mode = #tpu.pipeline_mode<synchronous>, transform_indices = @transform_4, window_bounds = array<i64: 1, 8>}, {transform_indices = @transform_5, window_bounds = array<i64: 1, 8, 256>}]} {
    %c0 = arith.constant 0 : index
    %c0_0 = arith.constant 0 : index
    %c0_1 = arith.constant 0 : index
    %0 = vector.load %arg1[%c0, %c0_0, %c0_1] : memref<1x8x256xf32, #tpu.memory_space<vmem>>, vector<1x8x256xf32>
    %cst = arith.constant dense<0.000000e+00> : vector<1x8xf32>
    %1 = vector.multi_reduction <add>, %0, %cst [2] : vector<1x8x256xf32> to vector<1x8xf32>
    %cst_2 = arith.constant 3.906250e-03 : f32
    %2 = vector.broadcast %cst_2 : f32 to vector<1x8xf32>
    %3 = arith.mulf %1, %2 : vector<1x8xf32>
    %c0_3 = arith.constant 0 : index
    %c0_4 = arith.constant 0 : index
    %4 = vector.load %arg2[%c0_3, %c0_4] : memref<8x2xf32, #tpu.memory_space<vmem>>, vector<8x2xf32>
    %cst_5 = arith.constant dense<0.000000e+00> : vector<1x2xf32>
    %5 = tpu.matmul %3, %4, %cst_5 {dimension_numbers = #tpu.dot_dimension_numbers<[1], [0], [0], [1], [0, 0, 1, 1], [], []>} : vector<1x8xf32>, vector<8x2xf32>, vector<1x2xf32> -> vector<1x2xf32>
    %c0_6 = arith.constant 0 : index
    %c0_7 = arith.constant 0 : index
    %6 = vector.load %arg3[%c0_6, %c0_7] : memref<1x2xf32, #tpu.memory_space<vmem>>, vector<1x2xf32>
    %7 = arith.addf %5, %6 : vector<1x2xf32>
    %8 = arith.negf %7 : vector<1x2xf32>
    %9 = math.exp %8 : vector<1x2xf32>
    %cst_8 = arith.constant 1.000000e+00 : f32
    %10 = vector.broadcast %cst_8 : f32 to vector<1x2xf32>
    %11 = arith.addf %10, %9 : vector<1x2xf32>
    %12 = arith.divf %10, %11 : vector<1x2xf32>
    %13 = arith.mulf %7, %12 : vector<1x2xf32>
    %c0_9 = arith.constant 0 : index
    %c0_10 = arith.constant 0 : index
    %14 = vector.load %arg4[%c0_9, %c0_10] : memref<2x8xf32, #tpu.memory_space<vmem>>, vector<2x8xf32>
    %cst_11 = arith.constant dense<0.000000e+00> : vector<1x8xf32>
    %15 = tpu.matmul %13, %14, %cst_11 {dimension_numbers = #tpu.dot_dimension_numbers<[1], [0], [0], [1], [0, 0, 1, 1], [], []>} : vector<1x2xf32>, vector<2x8xf32>, vector<1x8xf32> -> vector<1x8xf32>
    %c0_12 = arith.constant 0 : index
    %c0_13 = arith.constant 0 : index
    %16 = vector.load %arg5[%c0_12, %c0_13] : memref<1x8xf32, #tpu.memory_space<vmem>>, vector<1x8xf32>
    %17 = arith.addf %15, %16 : vector<1x8xf32>
    %18 = arith.negf %17 : vector<1x8xf32>
    %19 = math.exp %18 : vector<1x8xf32>
    %cst_14 = arith.constant 1.000000e+00 : f32
    %20 = vector.broadcast %cst_14 : f32 to vector<1x8xf32>
    %21 = arith.addf %20, %19 : vector<1x8xf32>
    %22 = arith.divf %20, %21 : vector<1x8xf32>
    %23 = vector.shape_cast %22 : vector<1x8xf32> to vector<1x8x1xf32>
    %24 = vector.broadcast %23 : vector<1x8x1xf32> to vector<1x8x256xf32>
    %25 = arith.mulf %0, %24 : vector<1x8x256xf32>
    %c0_15 = arith.constant 0 : index
    %c0_16 = arith.constant 0 : index
    %c0_17 = arith.constant 0 : index
    %26 = vector.load %arg6[%c0_15, %c0_16, %c0_17] : memref<1x8x256xf32, #tpu.memory_space<vmem>>, vector<1x8x256xf32>
    tpu.vector_store %arg6[%c0_15, %c0_16, %c0_17], %25 {strides = array<i32>} : memref<1x8x256xf32, #tpu.memory_space<vmem>>, vector<1x8x256xf32>,
    return
  }
  func.func @transform_0(%arg0: i32) -> (i32, i32, i32) {
    %c0_i32 = arith.constant 0 : i32
    %c0_i32_0 = arith.constant 0 : i32
    %c0_i32_1 = arith.constant 0 : i32
    return %arg0, %c0_i32, %c0_i32_0 : i32, i32, i32
  }
  func.func @transform_1(%arg0: i32) -> (i32, i32) {
    %c0_i32 = arith.constant 0 : i32
    %c0_i32_0 = arith.constant 0 : i32
    %c0_i32_1 = arith.constant 0 : i32
    return %c0_i32, %c0_i32_0 : i32, i32
  }
  func.func @transform_2(%arg0: i32) -> (i32, i32) {
    %c0_i32 = arith.constant 0 : i32
    %c0_i32_0 = arith.constant 0 : i32
    %c0_i32_1 = arith.constant 0 : i32
    return %c0_i32, %c0_i32_0 : i32, i32
  }
  func.func @transform_3(%arg0: i32) -> (i32, i32) {
    %c0_i32 = arith.constant 0 : i32
    %c0_i32_0 = arith.constant 0 : i32
    %c0_i32_1 = arith.constant 0 : i32
    return %c0_i32, %c0_i32_0 : i32, i32
  }
  func.func @transform_4(%arg0: i32) -> (i32, i32) {
    %c0_i32 = arith.constant 0 : i32
    %c0_i32_0 = arith.constant 0 : i32
    %c0_i32_1 = arith.constant 0 : i32
    return %c0_i32, %c0_i32_0 : i32, i32
  }
  func.func @transform_5(%arg0: i32) -> (i32, i32, i32) {
    %c0_i32 = arith.constant 0 : i32
    %c0_i32_0 = arith.constant 0 : i32
    %c0_i32_1 = arith.constant 0 : i32
    return %arg0, %c0_i32, %c0_i32_0 : i32, i32, i32
  }
}

</mosaic_0001>

<llo_original>
// kernel: tpu_custom_call.1
$region0: #{tpu_custom_call.1}
  #allocation0 [shape = 'u32[]', space=smem, size = 0x4, offset = 0x4, fixed_abs, tag = 'smem constant byte address 0x4 - core index']
  #allocation1 [shape = 'u32[144,128]{1,0:T(1,128)}', space=vmem, size = 0x12000, scoped, tag = 'internal scratch']
  %s0 = inlined_call_operand.hbm [shape: f32[2,8,256], index: 0, kind: input, shape index: {}]
  %s1 = inlined_call_operand.vmem [shape: f32[8,2], index: 1, kind: input, shape index: {}]
  %s2 = inlined_call_operand.vmem [shape: f32[1,2], index: 2, kind: input, shape index: {}]
  %s3 = inlined_call_operand.vmem [shape: f32[2,8], index: 3, kind: input, shape index: {}]
  %s4 = inlined_call_operand.vmem [shape: f32[1,8], index: 4, kind: input, shape index: {}]
  %s5 = inlined_call_operand.hbm [shape: f32[2,8,256], index: 5, kind: output, shape index: {}]
  %s6 = sld [smem:[#allocation0]]
  $region57: #{tpu_custom_call.1} parent=0
    _
  %s8 = ssub.s32 1, %s6
  %s9 = scalar_select 0, %s8, %s6
  $region1: #{tpu_custom_call.1} parent=0
    #allocation2 [shape = 'u8[16384]{0}', space=vmem, size = 0x4000, scoped, tag = 'input window, operand 0']
    #allocation3 [shape = 's32[2]{0}', space=sflag, size = 0x8, scoped, tag = 'scoped memory for tpu_custom_call.1']
    #allocation4 [shape = 's32[2]{0}', space=sflag, size = 0x8, scoped, tag = 'scoped memory for tpu_custom_call.1']
    #allocation5 [shape = 'u8[16384]{0}', space=vmem, size = 0x4000, scoped, tag = 'output window, operand 0']
    %10 = vsyncpa [#allocation3], 0
    %s11 = scalar_lea.sflag [#allocation3], 1
    %12 = vsyncpa %s11, 0
    %13 = vsyncpa [#allocation4], 0
    %s14 = scalar_lea.sflag [#allocation4], 1
    %15 = vsyncpa %s14, 0
    loop: start=0, step=1, limit=4
    $region2: #{tpu_custom_call.1} parent=1 // loop_pre_header
      _
    $region3: #{tpu_custom_call.1} parent=1 // loop_header
      %s17 = sphi 0, %s21
      %p18 = scmp.ge.s32.totalorder %s17, 4
      %s27 = sphi 0, %s29
      %s30 = sphi 0, %s27
      %s31 = sphi 0, %s30
      %s47 = sphi 0, %s31
      %s51 = sphi 0, %s51
      %s53 = sphi 0, %s51
      %s54 = sphi 0, %s53
      %s68 = sphi 0, %s54
      %s72 = sphi 0, %s72
      %s74 = sphi 0, %s72
      %s75 = sphi 0, %s74
      %s89 = sphi 0, %s75
      %s93 = sphi 0, %s93
      %s95 = sphi 0, %s93
      %s96 = sphi 0, %s95
      %s110 = sphi 0, %s96
      %s114 = sphi 0, %s114
      %s116 = sphi 0, %s114
      %s117 = sphi 0, %s116
      %s131 = sphi 0, %s117
      %s137 = sphi 0, %s139
      %s140 = sphi 0, %s137
      %s141 = sphi 0, %s140
      %s157 = sphi 0, %s141
    $region4: #{tpu_custom_call.1} parent=1 // loop_header_branch
      %20 = sbr.rel (%p18) target = $region8
    $region5: #{tpu_custom_call.1} parent=1 // loop_body
      %s22 = ssub.s32 %s17, 1
      %s23 = ssub.s32 %s17, 2
      %s24 = sadd.s32 %s17, 1
      %s25 = ssub.s32 %s17, %s24
      %p26 = scmp.eq.s32.totalorder %s25, 0
      %s28 = sadd.s32 %s27, 1
      %s29 = scalar_select %p26, %s27, %s28
      %p32 = pneg %p26
      %p33 = scmp.eq.s32.totalorder %s17, 1
      %p34 = por %p32, %p33
      %p35 = scmp.ne.s32.totalorder %s27, %s30
      %p36 = scmp.eq.s32.totalorder %s17, 0
      %p37 = por %p35, %p36
      %p38 = scmp.ne.s32.totalorder %s27, %s30
      %p39 = scmp.eq.s32.totalorder %s22, 1
      %p40 = por %p38, %p39
      %p41 = scmp.ne.s32.totalorder %s30, %s31
      %p42 = scmp.eq.s32.totalorder %s22, 0
      %p43 = por %p41, %p42
      %p44 = scmp.ne.s32.totalorder %s30, %s31
      %p45 = scmp.eq.s32.totalorder %s23, 1
      %p46 = por %p44, %p45
      %p48 = scmp.ne.s32.totalorder %s31, %s47
      %p49 = scmp.eq.s32.totalorder %s23, 0
      %p50 = por %p48, %p49
      %s52 = sadd.s32 %s51, 1
      %p55 = scmp.eq.s32.totalorder %s17, 1
      %p56 = scmp.ne.s32.totalorder %s51, %s53
      %p57 = scmp.eq.s32.totalorder %s17, 0
      %p58 = por %p56, %p57
      %p59 = scmp.ne.s32.totalorder %s51, %s53
      %p60 = scmp.eq.s32.totalorder %s22, 1
      %p61 = por %p59, %p60
      %p62 = scmp.ne.s32.totalorder %s53, %s54
      %p63 = scmp.eq.s32.totalorder %s22, 0
      %p64 = por %p62, %p63
      %p65 = scmp.ne.s32.totalorder %s53, %s54
      %p66 = scmp.eq.s32.totalorder %s23, 1
      %p67 = por %p65, %p66
      %p69 = scmp.ne.s32.totalorder %s54, %s68
      %p70 = scmp.eq.s32.totalorder %s23, 0
      %p71 = por %p69, %p70
      %s73 = sadd.s32 %s72, 1
      %p76 = scmp.eq.s32.totalorder %s17, 1
      %p77 = scmp.ne.s32.totalorder %s72, %s74
      %p78 = scmp.eq.s32.totalorder %s17, 0
      %p79 = por %p77, %p78
      %p80 = scmp.ne.s32.totalorder %s72, %s74
      %p81 = scmp.eq.s32.totalorder %s22, 1
      %p82 = por %p80, %p81
      %p83 = scmp.ne.s32.totalorder %s74, %s75
      %p84 = scmp.eq.s32.totalorder %s22, 0
      %p85 = por %p83, %p84
      %p86 = scmp.ne.s32.totalorder %s74, %s75
      %p87 = scmp.eq.s32.totalorder %s23, 1
      %p88 = por %p86, %p87
      %p90 = scmp.ne.s32.totalorder %s75, %s89
      %p91 = scmp.eq.s32.totalorder %s23, 0
      %p92 = por %p90, %p91
      %s94 = sadd.s32 %s93, 1
      %p97 = scmp.eq.s32.totalorder %s17, 1
      %p98 = scmp.ne.s32.totalorder %s93, %s95
      %p99 = scmp.eq.s32.totalorder %s17, 0
      %p100 = por %p98, %p99
      %p101 = scmp.ne.s32.totalorder %s93, %s95
      %p102 = scmp.eq.s32.totalorder %s22, 1
      %p103 = por %p101, %p102
      %p104 = scmp.ne.s32.totalorder %s95, %s96
      %p105 = scmp.eq.s32.totalorder %s22, 0
      %p106 = por %p104, %p105
      %p107 = scmp.ne.s32.totalorder %s95, %s96
      %p108 = scmp.eq.s32.totalorder %s23, 1
      %p109 = por %p107, %p108
      %p111 = scmp.ne.s32.totalorder %s96, %s110
      %p112 = scmp.eq.s32.totalorder %s23, 0
      %p113 = por %p111, %p112
      %s115 = sadd.s32 %s114, 1
      %p118 = scmp.eq.s32.totalorder %s17, 1
      %p119 = scmp.ne.s32.totalorder %s114, %s116
      %p120 = scmp.eq.s32.totalorder %s17, 0
      %p121 = por %p119, %p120
      %p122 = scmp.ne.s32.totalorder %s114, %s116
      %p123 = scmp.eq.s32.totalorder %s22, 1
      %p124 = por %p122, %p123
      %p125 = scmp.ne.s32.totalorder %s116, %s117
      %p126 = scmp.eq.s32.totalorder %s22, 0
      %p127 = por %p125, %p126
      %p128 = scmp.ne.s32.totalorder %s116, %s117
      %p129 = scmp.eq.s32.totalorder %s23, 1
      %p130 = por %p128, %p129
      %p132 = scmp.ne.s32.totalorder %s117, %s131
      %p133 = scmp.eq.s32.totalorder %s23, 0
      %p134 = por %p132, %p133
      %s135 = ssub.s32 %s17, %s24
      %p136 = scmp.eq.s32.totalorder %s135, 0
      %s138 = sadd.s32 %s137, 1
      %s139 = scalar_select %p136, %s137, %s138
      %p142 = pneg %p136
      %p143 = scmp.eq.s32.totalorder %s17, 1
      %p144 = por %p142, %p143
      %p145 = scmp.ne.s32.totalorder %s137, %s140
      %p146 = scmp.eq.s32.totalorder %s17, 0
      %p147 = por %p145, %p146
      %p148 = scmp.ne.s32.totalorder %s137, %s140
      %p149 = scmp.eq.s32.totalorder %s22, 1
      %p150 = por %p148, %p149
      %p151 = scmp.ne.s32.totalorder %s140, %s141
      %p152 = scmp.eq.s32.totalorder %s22, 0
      %p153 = por %p151, %p152
      %p154 = scmp.ne.s32.totalorder %s140, %s141
      %p155 = scmp.eq.s32.totalorder %s23, 1
      %p156 = por %p154, %p155
      %p158 = scmp.ne.s32.totalorder %s141, %s157
      %p159 = scmp.eq.s32.totalorder %s23, 0
      %p160 = por %p158, %p159
      %p161 = scmp.le.s32.totalorder 1, %s17
      %p162 = scmp.lt.s32.totalorder %s17, 3
      %p163 = pnand %p161, %p162
      %p164 = pneg %p163
      // Predicated region
      $region9: #{tpu_custom_call.1} parent=5 // pred_check
        _
      $region10: #{tpu_custom_call.1} parent=5 // pred_check_branch
        %166 = sbr.rel (%p163) target = $region12
      $region11: #{tpu_custom_call.1} parent=5 // pred_region
        %s167 = ssub.s32 %s17, 1
        // Predicated region
        $region13: #{tpu_custom_call.1} parent=11 // pred_check
          %p168 = pneg %p64
        $region14: #{tpu_custom_call.1} parent=11 // pred_check_branch
          %170 = sbr.rel (%p168) target = $region16
        $region15: #{tpu_custom_call.1} parent=11 // pred_region
          _
        $region16: #{tpu_custom_call.1} parent=11 // pred_fallthru
          _
        // Predicated region
        $region17: #{tpu_custom_call.1} parent=11 // pred_check
          %p171 = pneg %p85
        $region18: #{tpu_custom_call.1} parent=11 // pred_check_branch
          %173 = sbr.rel (%p171) target = $region20
        $region19: #{tpu_custom_call.1} parent=11 // pred_region
          _
        $region20: #{tpu_custom_call.1} parent=11 // pred_fallthru
          _
        // Predicated region
        $region21: #{tpu_custom_call.1} parent=11 // pred_check
          %p174 = pneg %p106
        $region22: #{tpu_custom_call.1} parent=11 // pred_check_branch
          %176 = sbr.rel (%p174) target = $region24
        $region23: #{tpu_custom_call.1} parent=11 // pred_region
          _
        $region24: #{tpu_custom_call.1} parent=11 // pred_fallthru
          _
        // Predicated region
        $region25: #{tpu_custom_call.1} parent=11 // pred_check
          %p177 = pneg %p127
        $region26: #{tpu_custom_call.1} parent=11 // pred_check_branch
          %179 = sbr.rel (%p177) target = $region28
        $region27: #{tpu_custom_call.1} parent=11 // pred_region
          _
        $region28: #{tpu_custom_call.1} parent=11 // pred_fallthru
          _
      $region12: #{tpu_custom_call.1} parent=5 // pred_fallthru
        _
      %p180 = scmp.lt.s32.totalorder %s17, 2
      // Predicated region
      $region29: #{tpu_custom_call.1} parent=5 // pred_check
        %p181 = pneg %p180
      $region30: #{tpu_custom_call.1} parent=5 // pred_check_branch
        %183 = sbr.rel (%p181) target = $region32
      $region31: #{tpu_custom_call.1} parent=5 // pred_region
        // Predicated region
        $region33: #{tpu_custom_call.1} parent=31 // pred_check
          %p184 = pneg %p37
        $region34: #{tpu_custom_call.1} parent=31 // pred_check_branch
          %186 = sbr.rel (%p184) target = $region36
        $region35: #{tpu_custom_call.1} parent=31 // pred_region
          %s187 = sand.u32 %s27, 1
          %s188 = scalar_lea.sflag [#allocation3], %s187
          %s189 = sand.u32 %s27, 1
          %s190 = smul.addr %s189, 16
          %s191 = scalar_lea.vmem [#allocation2], %s190
          %s193 = ssub.s32 256, 256
          %194 = vsyncadd %s188, %s193
          %s195 = smul.addr %s17, 2
          %s196 = smul.addr %s195, 128
          %s197 = scalar_lea.hbm %s0, %s196
          %s199 = sshll.u32 %s191, 4
          %s200 = int_to_ptr.vmem [resolvable:$true] %s199
          %202 = dma.hbm_to_vmem [thread:$0]  %s197, 256, %s200, %s188
        $region36: #{tpu_custom_call.1} parent=31 // pred_fallthru
          _
      $region32: #{tpu_custom_call.1} parent=5 // pred_fallthru
        _
      %p203 = scmp.le.s32.totalorder 1, %s17
      %p204 = scmp.lt.s32.totalorder %s17, 3
      %p205 = pnand %p203, %p204
      %p206 = pneg %p205
      // Predicated region
      $region37: #{tpu_custom_call.1} parent=5 // pred_check
        _
      $region38: #{tpu_custom_call.1} parent=5 // pred_check_branch
        %208 = sbr.rel (%p205) target = $region40
      $region39: #{tpu_custom_call.1} parent=5 // pred_region
        %s209 = ssub.s32 %s17, 1
        %s210 = sand.u32 %s30, 1
        %s211 = scalar_lea.sflag [#allocation3], %s210
        %s212 = sand.u32 %s30, 1
        %s213 = smul.addr %s212, 16
        %s214 = scalar_lea.vmem [#allocation2], %s213
        // Predicated region
        $region41: #{tpu_custom_call.1} parent=39 // pred_check
          %p215 = pneg %p43
        $region42: #{tpu_custom_call.1} parent=39 // pred_check_branch
          %217 = sbr.rel (%p215) target = $region44
        $region43: #{tpu_custom_call.1} parent=39 // pred_region
          %218 = dma.done %s211, 256
        $region44: #{tpu_custom_call.1} parent=39 // pred_fallthru
          _
        %s219 = sand.u32 %s30, 1
        %s220 = scalar_lea.sflag [#allocation3], %s219
        %s221 = sand.u32 %s30, 1
        %s222 = smul.addr %s221, 16
        %s223 = scalar_lea.vmem [#allocation2], %s222
        %p224 = pneg %p43
        %p225 = pneg %p40
        %p226 = pneg %p64
        %p227 = pneg %p61
        %p228 = pneg %p85
        %p229 = pneg %p82
        %p230 = pneg %p106
        %p231 = pneg %p103
        %p232 = pneg %p127
        %p233 = pneg %p124
        %p234 = pneg %p153
        %p235 = pneg %p150
        %s236 = sand.u32 %s140, 1
        %s237 = scalar_lea.sflag [#allocation4], %s236
        %s238 = sand.u32 %s140, 1
        %s239 = smul.addr %s238, 16
        %s240 = scalar_lea.vmem [#allocation5], %s239
        %v241 = vld [vmem:[%s214] sm:$0xff]
        %v242 = vld [vmem:[%s214 + $0x8] sm:$0xff]
        %v243 = vadd.f32 %v241, %v242
        %244 = vadd.xlane.f32.xlu0 %v243
        %v245 = vpop.xlane.xlu0 %244
        %v246 = vmul.f32 %v245, 0.00390625
        %v247 = vld [vmem:[%s1] sm:$0xff]
        %v248 = vld [vmem:[%s2] sm:$0x1]
        %v250 = vlaneseq
        %v251 = vand.u32 %v250, 127
        %v252 = vlaneseq
        %v253 = vshrl.u32 %v252, 7
        %v254 = vsub.s32 %v251, %v253
        %v255 = vrot.slane %v246, %v254
        %vm256 = vcmask 64512
        %v257 = vsel %vm256, %v255, 0
        %259 = vmatprep.subr.mxu0 0.0
        %260 = vmatpush1.msra.mxu0 0.0
        %261 = vmatprep.subr.mxu0 0.0
        %262 = vmatpush1.msra.mxu0 0.0
        %263 = vmatprep.subr.mxu0 0.0
        %264 = vmatpush1.msra.mxu0 0.0
        %265 = vmatprep.subr.mxu0 0.0
        %266 = vmatpush1.msra.mxu0 0.0
        %267 = vmatprep.subr.mxu0 0.0
        %268 = vmatpush1.msra.mxu0 0.0
        %269 = vmatprep.subr.mxu0 0.0
        %270 = vmatpush1.msra.mxu0 0.0
        %271 = vmatprep.subr.mxu0 0.0
        %272 = vmatpush1.msra.mxu0 0.0
        %273 = vmatprep.subr.mxu0 0.0
        %274 = vmatpush1.msra.mxu0 0.0
        %275 = vmatprep.subr.mxu0 0.0
        %276 = vmatpush1.msra.mxu0 0.0
        %277 = vmatprep.subr.mxu0 0.0
        %278 = vmatpush1.msra.mxu0 0.0
        %279 = vmatprep.subr.mxu0 0.0
        %280 = vmatpush1.msra.mxu0 0.0
        %281 = vmatprep.subr.mxu0 0.0
        %282 = vmatpush1.msra.mxu0 0.0
        %283 = vmatprep.subr.mxu0 0.0
        %284 = vmatpush1.msra.mxu0 0.0
        %285 = vmatprep.subr.mxu0 0.0
        %286 = vmatpush1.msra.mxu0 0.0
        %287 = vmatprep.subr.mxu0 0.0
        %288 = vmatpush1.msra.mxu0 0.0
        %289 = vmatprep.subr.mxu0 0.0
        %290 = vmatpush1.msra.mxu0 %v247
        %291 = vmatprep.subr.mxu0 0.0
        %292 = vmatpush2.msra.mxu0 0.0
        %293 = vmatprep.subr.mxu0 0.0
        %294 = vmatpush2.msra.mxu0 0.0
        %295 = vmatprep.subr.mxu0 0.0
        %296 = vmatpush2.msra.mxu0 0.0
        %297 = vmatprep.subr.mxu0 0.0
        %298 = vmatpush2.msra.mxu0 0.0
        %299 = vmatprep.subr.mxu0 0.0
        %300 = vmatpush2.msra.mxu0 0.0
        %301 = vmatprep.subr.mxu0 0.0
        %302 = vmatpush2.msra.mxu0 0.0
        %303 = vmatprep.subr.mxu0 0.0
        %304 = vmatpush2.msra.mxu0 0.0
        %305 = vmatprep.subr.mxu0 0.0
        %306 = vmatpush2.msra.mxu0 0.0
        %307 = vmatprep.subr.mxu0 0.0
        %308 = vmatpush2.msra.mxu0 0.0
        %309 = vmatprep.subr.mxu0 0.0
        %310 = vmatpush2.msra.mxu0 0.0
        %311 = vmatprep.subr.mxu0 0.0
        %312 = vmatpush2.msra.mxu0 0.0
        %313 = vmatprep.subr.mxu0 0.0
        %314 = vmatpush2.msra.mxu0 0.0
        %315 = vmatprep.subr.mxu0 0.0
        %316 = vmatpush2.msra.mxu0 0.0
        %317 = vmatprep.subr.mxu0 0.0
        %318 = vmatpush2.msra.mxu0 0.0
        %319 = vmatprep.subr.mxu0 0.0
        %320 = vmatpush2.msra.mxu0 0.0
        %321 = vmatprep.subr.mxu0 0.0
        %322 = vmatpush2.msra.mxu0 0.0
        %323 = vmatprep.mubr.f32.mxu0 0.0
        %324 = vmatmul.mubr.f32.gmra.mxu0 %v257
        %v325 = vpop.f32.mrf.mxu0
        %v326 = vadd.f32 %v248, %v325
        %v327 = vpop.f32.mrf.mxu0
        %328 = vdwg.mxu0
        %v329 = vxor.u32 %v326, 2147483648
        %v330 = vmul.f32 %v329, 1.442695
        %v331 = vpow.pop %v330
        %v332 = vadd.f32 %v331, 1.0
        %v333 = vrcp.pop %v332
        %v334 = vmul.f32 1.0, %v333
        %v335 = vmul.f32 %v326, %v334
        %v336 = vld [vmem:[%s3] sm:$0x3]
        %v337 = vld [vmem:[%s4] sm:$0x1]
        %vm338 = vcmask 15360
        %v340 = vsel %vm338, %v335, 0
        %vm342 = vcmask 1041408
        %v344 = vsel %vm342, %v336, 0
        %346 = vmatprep.subr.mxu0 0.0
        %347 = vmatpush1.msra.mxu0 0.0
        %348 = vmatprep.subr.mxu0 0.0
        %349 = vmatpush1.msra.mxu0 0.0
        %350 = vmatprep.subr.mxu0 0.0
        %351 = vmatpush1.msra.mxu0 0.0
        %352 = vmatprep.subr.mxu0 0.0
        %353 = vmatpush1.msra.mxu0 0.0
        %354 = vmatprep.subr.mxu0 0.0
        %355 = vmatpush1.msra.mxu0 0.0
        %356 = vmatprep.subr.mxu0 0.0
        %357 = vmatpush1.msra.mxu0 0.0
        %358 = vmatprep.subr.mxu0 0.0
        %359 = vmatpush1.msra.mxu0 0.0
        %360 = vmatprep.subr.mxu0 0.0
        %361 = vmatpush1.msra.mxu0 0.0
        %362 = vmatprep.subr.mxu0 0.0
        %363 = vmatpush1.msra.mxu0 0.0
        %364 = vmatprep.subr.mxu0 0.0
        %365 = vmatpush1.msra.mxu0 0.0
        %366 = vmatprep.subr.mxu0 0.0
        %367 = vmatpush1.msra.mxu0 0.0
        %368 = vmatprep.subr.mxu0 0.0
        %369 = vmatpush1.msra.mxu0 0.0
        %370 = vmatprep.subr.mxu0 0.0
        %371 = vmatpush1.msra.mxu0 0.0
        %372 = vmatprep.subr.mxu0 0.0
        %373 = vmatpush1.msra.mxu0 0.0
        %374 = vmatprep.subr.mxu0 0.0
        %375 = vmatpush1.msra.mxu0 0.0
        %376 = vmatprep.subr.mxu0 0.0
        %377 = vmatpush1.msra.mxu0 %v344
        %378 = vmatprep.subr.mxu0 0.0
        %379 = vmatpush2.msra.mxu0 0.0
        %380 = vmatprep.subr.mxu0 0.0
        %381 = vmatpush2.msra.mxu0 0.0
        %382 = vmatprep.subr.mxu0 0.0
        %383 = vmatpush2.msra.mxu0 0.0
        %384 = vmatprep.subr.mxu0 0.0
        %385 = vmatpush2.msra.mxu0 0.0
        %386 = vmatprep.subr.mxu0 0.0
        %387 = vmatpush2.msra.mxu0 0.0
        %388 = vmatprep.subr.mxu0 0.0
        %389 = vmatpush2.msra.mxu0 0.0
        %390 = vmatprep.subr.mxu0 0.0
        %391 = vmatpush2.msra.mxu0 0.0
        %392 = vmatprep.subr.mxu0 0.0
        %393 = vmatpush2.msra.mxu0 0.0
        %394 = vmatprep.subr.mxu0 0.0
        %395 = vmatpush2.msra.mxu0 0.0
        %396 = vmatprep.subr.mxu0 0.0
        %397 = vmatpush2.msra.mxu0 0.0
        %398 = vmatprep.subr.mxu0 0.0
        %399 = vmatpush2.msra.mxu0 0.0
        %400 = vmatprep.subr.mxu0 0.0
        %401 = vmatpush2.msra.mxu0 0.0
        %402 = vmatprep.subr.mxu0 0.0
        %403 = vmatpush2.msra.mxu0 0.0
        %404 = vmatprep.subr.mxu0 0.0
        %405 = vmatpush2.msra.mxu0 0.0
        %406 = vmatprep.subr.mxu0 0.0
        %407 = vmatpush2.msra.mxu0 0.0
        %408 = vmatprep.subr.mxu0 0.0
        %409 = vmatpush2.msra.mxu0 0.0
        %410 = vmatprep.mubr.f32.mxu0 0.0
        %411 = vmatmul.mubr.f32.gmra.mxu0 %v340
        %v412 = vpop.f32.mrf.mxu0
        %v413 = vadd.f32 %v337, %v412
        %v414 = vpop.f32.mrf.mxu0
        %415 = vdwg.mxu0
        %v416 = vxor.u32 %v413, 2147483648
        %v417 = vmul.f32 %v416, 1.442695
        %v418 = vpow.pop %v417
        %v419 = vadd.f32 %v418, 1.0
        %v420 = vrcp.pop %v419
        %v421 = vmul.f32 1.0, %v420
        %v422 = vlaneseq
        %v423 = vshrl.u32 %v422, 7
        %v424 = vsub.s32 0, %v423
        %v425 = vrot.slane %v421, %v424
        %427 = vbcast.lane.b32.xlu0 %v425, 256
        %v428 = vpop.permute.xlu0 %427
        %v429 = vmul.f32 %v241, %v428
        %v430 = vmul.f32 %v242, %v428
        %431 = vst [vmem:[%s240] sm:$0xff] %v429
        %432 = vst [vmem:[%s240 + $0x8] sm:$0xff] %v430
        %s433 = sand.u32 %s140, 1
        %s434 = scalar_lea.sflag [#allocation4], %s433
        %s435 = sand.u32 %s140, 1
        %s436 = smul.addr %s435, 16
        %s437 = scalar_lea.vmem [#allocation5], %s436
        // Predicated region
        $region45: #{tpu_custom_call.1} parent=39 // pred_check
          %p438 = pneg %p150
        $region46: #{tpu_custom_call.1} parent=39 // pred_check_branch
          %440 = sbr.rel (%p438) target = $region48
        $region47: #{tpu_custom_call.1} parent=39 // pred_region
          %s442 = ssub.s32 256, 256
          %443 = vsyncadd %s434, %s442
          %s444 = smul.addr %s22, 2
          %s445 = smul.addr %s444, 128
          %s446 = scalar_lea.hbm %s5, %s445
          %s448 = sshll.u32 %s437, 4
          %s449 = int_to_ptr.vmem [resolvable:$true] %s448
          %451 = dma.vmem_to_hbm [thread:$0]  %s449, 256, %s446, %s434
        $region48: #{tpu_custom_call.1} parent=39 // pred_fallthru
          _
      $region40: #{tpu_custom_call.1} parent=5 // pred_fallthru
        _
      %p452 = scmp.le.s32.totalorder 2, %s17
      // Predicated region
      $region49: #{tpu_custom_call.1} parent=5 // pred_check
        %p453 = pneg %p452
      $region50: #{tpu_custom_call.1} parent=5 // pred_check_branch
        %455 = sbr.rel (%p453) target = $region52
      $region51: #{tpu_custom_call.1} parent=5 // pred_region
        %s456 = ssub.s32 %s17, 2
        // Predicated region
        $region53: #{tpu_custom_call.1} parent=51 // pred_check
          %p457 = pneg %p156
        $region54: #{tpu_custom_call.1} parent=51 // pred_check_branch
          %459 = sbr.rel (%p457) target = $region56
        $region55: #{tpu_custom_call.1} parent=51 // pred_region
          %s460 = sand.u32 %s141, 1
          %s461 = scalar_lea.sflag [#allocation4], %s460
          %s462 = sand.u32 %s141, 1
          %s463 = smul.addr %s462, 16
          %s464 = scalar_lea.vmem [#allocation5], %s463
          %465 = dma.done %s461, 256
        $region56: #{tpu_custom_call.1} parent=51 // pred_fallthru
          _
      $region52: #{tpu_custom_call.1} parent=5 // pred_fallthru
        _
    $region6: #{tpu_custom_call.1} parent=1 // loop_footer
      %s21 = sadd.s32 1, %s17
    $region7: #{tpu_custom_call.1} parent=1 // loop_footer_branch
      %16 = sbr.rel target = $region3
    $region8: #{tpu_custom_call.1} parent=1 // loop_exit
      _
    %466 = vsyncpa [#allocation3], 1
    %s467 = scalar_lea.sflag [#allocation3], 1
    %468 = vsyncpa %s467, 1
    %469 = vsyncpa [#allocation4], 1
    %s470 = scalar_lea.sflag [#allocation4], 1
    %471 = vsyncpa %s470, 1

</llo_original>
